<compile_context>
chip_gen: v5e
topology: v5e:2x2
jax: 0.10.0
libtpu: 0.0.40
codegen_flags: <defaults>
</compile_context>

<pallas_src>
import jax
import jax.numpy as jnp
from jax.experimental import pallas as pl
from jax.experimental.pallas import tpu as pltpu

INPUT_SIZE = 196
HIDDEN_SIZE = 10
NUM_CLASSES = 10

# Lane-dense padded widths (multiples of 128) for hidden / output dims so all
# stores are unmasked full-lane `vst`s.
HIDDEN_PAD = 128
CLASSES_PAD = 128

# Max rows per grid step. At 8192 rows: 2x f32 x-buffers (~12.8 MiB) +
# 2x out-buffers (<=8 MiB f32) + weights (~0.2 MiB) ~= 21-23 MiB, which fits
# every generation (incl. v7x's 64 MiB physical VMEM) once vmem_limit_bytes is
# raised explicitly below.
MAX_TILE_B = 8192


def _round_up(n, m):
    return ((n + m - 1) // m) * m


def _choose_tile(batch):
    """Rows per grid step: multiple of 8, <= MAX_TILE_B, and aim for >=2 grid
    steps on mid-size batches so v7x's two TensorCores both get work."""
    if batch <= 8:
        return 8
    half = _round_up(-(-batch // 2), 8)          # ceil(B/2) rounded up to 8
    return max(8, min(MAX_TILE_B, half))


def mlp_kernel(x_ref, w1_ref, b1_ref, w2_ref, b2_ref, o_ref):
    # Cast x to the compute dtype in VMEM (free vs. an extra XLA HBM pass).
    x = x_ref[...].astype(w1_ref.dtype)
    # layer1: x @ W1 + b1 on the MXU with f32 accumulation, then ReLU.
    h = jnp.dot(x, w1_ref[...], preferred_element_type=jnp.float32)
    h = jnp.maximum(h + b1_ref[...], 0.0)                 # b1 is (1, HIDDEN_PAD)
    # layer2: h @ W2 + b2 (h cast to weight dtype so the MXU runs bf16 when enabled).
    out = jnp.dot(h.astype(w2_ref.dtype), w2_ref[...],
                  preferred_element_type=jnp.float32)
    o_ref[...] = (out + b2_ref[...]).astype(o_ref.dtype)  # store in compute dtype


def prepare_params(w1, b1, w2, b2, compute_dtype=jnp.bfloat16):
    """One-time parameter prep (outside the per-step wrapper).

    PyTorch convention in: w1 [hidden, input], b1 [hidden],
                           w2 [classes, hidden], b2 [classes].
    Returns weights transposed to [in, out], zero-padded to lane-dense widths,
    cast to `compute_dtype`; biases kept f32 for exact f32 accumulation.
    """
    w1_t = jnp.zeros((INPUT_SIZE, HIDDEN_PAD), jnp.float32)
    w1_t = w1_t.at[:, :HIDDEN_SIZE].set(w1.T)
    b1_p = jnp.zeros((1, HIDDEN_PAD), jnp.float32)
    b1_p = b1_p.at[:, :HIDDEN_SIZE].set(b1)

    w2_t = jnp.zeros((HIDDEN_PAD, CLASSES_PAD), jnp.float32)
    w2_t = w2_t.at[:HIDDEN_SIZE, :NUM_CLASSES].set(w2.T)
    b2_p = jnp.zeros((1, CLASSES_PAD), jnp.float32)
    b2_p = b2_p.at[:, :NUM_CLASSES].set(b2)

    return (w1_t.astype(compute_dtype), b1_p, w2_t.astype(compute_dtype), b2_p)


def _net_forward_padded(x, params):
    """x: [B, INPUT_SIZE] (f32 or bf16). Returns lane-dense [B, CLASSES_PAD]
    logits in the compute dtype (columns NUM_CLASSES..127 are the zero-padded
    channels). Slice/consume downstream to avoid an extra HBM pass."""
    w1_p, b1_p, w2_p, b2_p = params
    compute_dtype = w1_p.dtype
    B = x.shape[0]

    tile_b = _choose_tile(B)
    grid = (pl.cdiv(B, tile_b),)   # final block may be partial; Pallas masks OOB writes

    # Explicit VMEM budget: double-buffered x + out tiles, resident weights, headroom.
    x_bytes = jnp.dtype(x.dtype).itemsize
    o_bytes = jnp.dtype(compute_dtype).itemsize
    w_bytes = jnp.dtype(compute_dtype).itemsize
    vmem_limit = (2 * tile_b * INPUT_SIZE * x_bytes
                  + 2 * tile_b * CLASSES_PAD * o_bytes
                  + (INPUT_SIZE * HIDDEN_PAD + HIDDEN_PAD * CLASSES_PAD) * w_bytes
                  + (HIDDEN_PAD + CLASSES_PAD) * 4
                  + (4 << 20))                       # headroom for compiler scratch
    vmem_limit = int(min(max(vmem_limit, 32 << 20), 60 << 20))  # stay under v7x 64 MiB

    out = pl.pallas_call(
        mlp_kernel,
        out_shape=jax.ShapeDtypeStruct((B, CLASSES_PAD), compute_dtype),
        grid=grid,
        in_specs=[
            pl.BlockSpec((tile_b, INPUT_SIZE), lambda i: (i, 0)),       # x tile (streamed)
            pl.BlockSpec((INPUT_SIZE, HIDDEN_PAD), lambda i: (0, 0)),   # w1 (resident)
            pl.BlockSpec((1, HIDDEN_PAD), lambda i: (0, 0)),            # b1
            pl.BlockSpec((HIDDEN_PAD, CLASSES_PAD), lambda i: (0, 0)),  # w2
            pl.BlockSpec((1, CLASSES_PAD), lambda i: (0, 0)),           # b2
        ],
        out_specs=pl.BlockSpec((tile_b, CLASSES_PAD), lambda i: (i, 0)),
        compiler_params=pltpu.CompilerParams(
            dimension_semantics=("parallel",),       # megacore sharding on v7x
            vmem_limit_bytes=vmem_limit,
        ),
    )(x, w1_p, b1_p, w2_p, b2_p)
    return out


def _net_forward(x, params):
    """Convenience wrapper returning exactly [B, NUM_CLASSES] (extra HBM slice pass;
    prefer net_forward_padded when the consumer can take the padded logits)."""
    return _net_forward_padded(x, params)[:, :NUM_CLASSES]


net_forward_padded = jax.jit(_net_forward_padded)
net_forward = jax.jit(_net_forward)


def init_params(key):
    """Deterministic init mimicking PyTorch Linear default (uniform +-1/sqrt(fan_in)),
    PyTorch convention: W: [out, in], b: [out]."""
    k1, k2, k3, k4 = jax.random.split(key, 4)
    bound1 = 1.0 / (INPUT_SIZE ** 0.5)
    bound2 = 1.0 / (HIDDEN_SIZE ** 0.5)
    w1 = jax.random.uniform(k1, (HIDDEN_SIZE, INPUT_SIZE), jnp.float32, -bound1, bound1)
    b1 = jax.random.uniform(k2, (HIDDEN_SIZE,), jnp.float32, -bound1, bound1)
    w2 = jax.random.uniform(k3, (NUM_CLASSES, HIDDEN_SIZE), jnp.float32, -bound2, bound2)
    b2 = jax.random.uniform(k4, (NUM_CLASSES,), jnp.float32, -bound2, bound2)
    return w1, b1, w2, b2


if __name__ == "__main__":
    key = jax.random.PRNGKey(0)
    k_x, k_p, k_x2 = jax.random.split(key, 3)

    w1, b1, w2, b2 = init_params(k_p)

    # --- Small batch (2 rows -> one partial tile, exercises OOB masking) ---
    B = 2
    x = jax.random.normal(k_x, (B, INPUT_SIZE), dtype=jnp.float32)
    ref = jnp.maximum(x @ w1.T + b1, 0.0) @ w2.T + b2

    # f32 path: bit-faithful to the PyTorch module (f32 weights, f32 output).
    params_f32 = prepare_params(w1, b1, w2, b2, compute_dtype=jnp.float32)
    out_f32 = jax.block_until_ready(net_forward(x, params_f32))
    assert out_f32.shape == (B, NUM_CLASSES)
    assert out_f32.dtype == jnp.float32
    assert jnp.allclose(out_f32, ref, atol=1e-5, rtol=1e-5)

    # bf16 path: bf16 weights/activations/output, f32 MXU accumulation.
    params_bf16 = prepare_params(w1, b1, w2, b2, compute_dtype=jnp.bfloat16)
    out_bf16 = jax.block_until_ready(net_forward(x, params_bf16))
    assert out_bf16.shape == (B, NUM_CLASSES)
    assert out_bf16.dtype == jnp.bfloat16
    assert jnp.allclose(out_bf16.astype(jnp.float32), ref, atol=1e-1, rtol=5e-2)

    # --- Ragged batch (not a multiple of the tile): >=2 grid steps, no jnp.pad ---
    B2 = 100
    x2 = jax.random.normal(k_x2, (B2, INPUT_SIZE), dtype=jnp.float32)
    ref2 = jnp.maximum(x2 @ w1.T + b1, 0.0) @ w2.T + b2
    out2 = jax.block_until_ready(net_forward(x2, params_f32))
    assert out2.shape == (B2, NUM_CLASSES)
    assert jnp.allclose(out2, ref2, atol=1e-5, rtol=1e-5)

    # Padded (lane-dense) output path, for callers that defer the slice.
    out2_pad = jax.block_until_ready(net_forward_padded(x2, params_f32))
    assert out2_pad.shape == (B2, CLASSES_PAD)
    assert jnp.allclose(out2_pad[:, :NUM_CLASSES], ref2, atol=1e-5, rtol=1e-5)

    print("KERNEL_OK")
</pallas_src>

<mosaic_0001>
module attributes {stable_mosaic.version = 11 : i64} {
  func.func @mlp_kernel(%arg0: i32, %arg1: memref<8x196xf32, #tpu.memory_space<vmem>>, %arg2: memref<196x128xf32, #tpu.memory_space<vmem>>, %arg3: memref<1x128xf32, #tpu.memory_space<vmem>>, %arg4: memref<128x128xf32, #tpu.memory_space<vmem>>, %arg5: memref<1x128xf32, #tpu.memory_space<vmem>>, %arg6: memref<8x128xf32, #tpu.memory_space<vmem>>) attributes {dimension_semantics = [#tpu.dimension_semantics<parallel>], iteration_bounds = array<i64: 1>, scalar_prefetch = 0 : i64, scratch_operands = 0 : i64, tpu.core_type = #tpu.core_type<tc>, window_params = [{transform_indices = @transform_0, window_bounds = array<i64: 8, 196>}, {pipeline_mode = #tpu.pipeline_mode<synchronous>, transform_indices = @transform_1, window_bounds = array<i64: 196, 128>}, {pipeline_mode = #tpu.pipeline_mode<synchronous>, transform_indices = @transform_2, window_bounds = array<i64: 1, 128>}, {pipeline_mode = #tpu.pipeline_mode<synchronous>, transform_indices = @transform_3, window_bounds = array<i64: 128, 128>}, {pipeline_mode = #tpu.pipeline_mode<synchronous>, transform_indices = @transform_4, window_bounds = array<i64: 1, 128>}, {transform_indices = @transform_5, window_bounds = array<i64: 8, 128>}]} {
    %c0 = arith.constant 0 : index
    %c0_0 = arith.constant 0 : index
    %0 = vector.load %arg1[%c0, %c0_0] : memref<8x196xf32, #tpu.memory_space<vmem>>, vector<8x196xf32>
    %c0_1 = arith.constant 0 : index
    %c0_2 = arith.constant 0 : index
    %1 = vector.load %arg2[%c0_1, %c0_2] : memref<196x128xf32, #tpu.memory_space<vmem>>, vector<196x128xf32>
    %cst = arith.constant dense<0.000000e+00> : vector<8x128xf32>
    %2 = tpu.matmul %0, %1, %cst {dimension_numbers = #tpu.dot_dimension_numbers<[1], [0], [0], [1], [0, 0, 1, 1], [], []>} : vector<8x196xf32>, vector<196x128xf32>, vector<8x128xf32> -> vector<8x128xf32>
    %c0_3 = arith.constant 0 : index
    %c0_4 = arith.constant 0 : index
    %3 = vector.load %arg3[%c0_3, %c0_4] : memref<1x128xf32, #tpu.memory_space<vmem>>, vector<1x128xf32>
    %4 = vector.broadcast %3 : vector<1x128xf32> to vector<8x128xf32>
    %5 = arith.addf %2, %4 : vector<8x128xf32>
    %cst_5 = arith.constant 0.000000e+00 : f32
    %6 = vector.broadcast %cst_5 : f32 to vector<8x128xf32>
    %7 = arith.maximumf %5, %6 : vector<8x128xf32>
    %c0_6 = arith.constant 0 : index
    %c0_7 = arith.constant 0 : index
    %8 = vector.load %arg4[%c0_6, %c0_7] : memref<128x128xf32, #tpu.memory_space<vmem>>, vector<128x128xf32>
    %cst_8 = arith.constant dense<0.000000e+00> : vector<8x128xf32>
    %9 = tpu.matmul %7, %8, %cst_8 {dimension_numbers = #tpu.dot_dimension_numbers<[1], [0], [0], [1], [0, 0, 1, 1], [], []>} : vector<8x128xf32>, vector<128x128xf32>, vector<8x128xf32> -> vector<8x128xf32>
    %c0_9 = arith.constant 0 : index
    %c0_10 = arith.constant 0 : index
    %10 = vector.load %arg5[%c0_9, %c0_10] : memref<1x128xf32, #tpu.memory_space<vmem>>, vector<1x128xf32>
    %11 = vector.broadcast %10 : vector<1x128xf32> to vector<8x128xf32>
    %12 = arith.addf %9, %11 : vector<8x128xf32>
    %c0_11 = arith.constant 0 : index
    %c0_12 = arith.constant 0 : index
    %13 = vector.load %arg6[%c0_11, %c0_12] : memref<8x128xf32, #tpu.memory_space<vmem>>, vector<8x128xf32>
    tpu.vector_store %arg6[%c0_11, %c0_12], %12 {strides = array<i32>} : memref<8x128xf32, #tpu.memory_space<vmem>>, vector<8x128xf32>,
    return
  }
  func.func @transform_0(%arg0: i32) -> (i32, i32) {
    %c0_i32 = arith.constant 0 : i32
    %c0_i32_0 = arith.constant 0 : i32
    return %arg0, %c0_i32 : i32, i32
  }
  func.func @transform_1(%arg0: i32) -> (i32, i32) {
    %c0_i32 = arith.constant 0 : i32
    %c0_i32_0 = arith.constant 0 : i32
    %c0_i32_1 = arith.constant 0 : i32
    return %c0_i32, %c0_i32_0 : i32, i32
  }
  func.func @transform_2(%arg0: i32) -> (i32, i32) {
    %c0_i32 = arith.constant 0 : i32
    %c0_i32_0 = arith.constant 0 : i32
    %c0_i32_1 = arith.constant 0 : i32
    return %c0_i32, %c0_i32_0 : i32, i32
  }
  func.func @transform_3(%arg0: i32) -> (i32, i32) {
    %c0_i32 = arith.constant 0 : i32
    %c0_i32_0 = arith.constant 0 : i32
    %c0_i32_1 = arith.constant 0 : i32
    return %c0_i32, %c0_i32_0 : i32, i32
  }
  func.func @transform_4(%arg0: i32) -> (i32, i32) {
    %c0_i32 = arith.constant 0 : i32
    %c0_i32_0 = arith.constant 0 : i32
    %c0_i32_1 = arith.constant 0 : i32
    return %c0_i32, %c0_i32_0 : i32, i32
  }
  func.func @transform_5(%arg0: i32) -> (i32, i32) {
    %c0_i32 = arith.constant 0 : i32
    %c0_i32_0 = arith.constant 0 : i32
    return %arg0, %c0_i32 : i32, i32
  }
}

</mosaic_0001>

<llo_original>
// kernel: _net_forward.1
$region0: #{_net_forward.1}
  #allocation0 [shape = 'u32[]', space=smem, size = 0x4, offset = 0x4, fixed_abs, tag = 'smem constant byte address 0x4 - core index']
  #allocation1 [shape = 'u32[72,128]{1,0:T(1,128)}', space=vmem, size = 0x9000, scoped, tag = 'internal scratch']
  %s0 = inlined_call_operand.hbm [shape: f32[2,196], index: 0, kind: input, shape index: {}]
  %s1 = inlined_call_operand.hbm [shape: f32[196,128], index: 1, kind: input, shape index: {}]
  %s2 = inlined_call_operand.vmem [shape: f32[1,128], index: 2, kind: input, shape index: {}]
  %s3 = inlined_call_operand.hbm [shape: f32[128,128], index: 3, kind: input, shape index: {}]
  %s4 = inlined_call_operand.vmem [shape: f32[1,128], index: 4, kind: input, shape index: {}]
  %s5 = inlined_call_operand.hbm [shape: f32[2,128], index: 5, kind: output, shape index: {}]
  %s6 = sld [smem:[#allocation0]]
  $region42: #{_net_forward.1} parent=0
    _
  %s8 = ssub.s32 1, %s6
  %s9 = scalar_select 0, %s8, %s6
  $region1: #{_net_forward.1} parent=0
    #allocation2 [shape = 'u8[8192]{0}', space=vmem, size = 0x2000, scoped, tag = 'input window, operand 0, single buffered']
    #allocation3 [shape = 's32[1]{0}', space=sflag, size = 0x4, scoped, tag = 'scoped memory for _net_forward.1']
    #allocation4 [shape = 's32[1]{0}', space=sflag, size = 0x4, scoped, tag = 'scoped memory for _net_forward.1']
    #allocation5 [shape = 'u8[102400]{0}', space=vmem, size = 0x19000, scoped, tag = 'input window, operand 1, single buffered']
    #allocation6 [shape = 's32[1]{0}', space=sflag, size = 0x4, scoped, tag = 'scoped memory for _net_forward.1']
    #allocation7 [shape = 'u8[65536]{0}', space=vmem, size = 0x10000, scoped, tag = 'input window, operand 3, single buffered']
    #allocation8 [shape = 'u8[4096]{0}', space=vmem, size = 0x1000, scoped, tag = 'output window, operand 0, single buffered']
    %10 = vsyncpa [#allocation3], 0
    %11 = vsyncpa [#allocation6], 0
    %12 = vsyncpa [#allocation4], 0
    // Predicated region
    $region2: #{_net_forward.1} parent=1 // pred_check
      _
    $region3: #{_net_forward.1} parent=1 // pred_check_branch
      %14 = sbr.rel (0) target = $region5
    $region4: #{_net_forward.1} parent=1 // pred_region
      %16 = vsyncadd [#allocation3], 192
      %s17 = sshll.u32 %s0, 4
      %s18 = int_to_ptr.hbm [resolvable:$true] %s17
      %s19 = sshll.u32 [#allocation2], 4
      %s20 = int_to_ptr.vmem [resolvable:$true] %s19
      %25 = dma.hbm_to_vmem [thread:$0]  %s18, 64, %s20, [#allocation3], 64, 64, 4
    $region5: #{_net_forward.1} parent=1 // pred_fallthru
      _
    // Predicated region
    $region6: #{_net_forward.1} parent=1 // pred_check
      _
    $region7: #{_net_forward.1} parent=1 // pred_check_branch
      %27 = sbr.rel (0) target = $region9
    $region8: #{_net_forward.1} parent=1 // pred_region
      %29 = vsyncadd [#allocation6], 0
      %s30 = sshll.u32 %s1, 4
      %s31 = int_to_ptr.hbm [resolvable:$true] %s30
      %s32 = sshll.u32 [#allocation5], 4
      %s33 = int_to_ptr.vmem [resolvable:$true] %s32
      %38 = dma.hbm_to_vmem [thread:$0]  %s31, 3200, %s33, [#allocation6], 128, 128, 8
    $region9: #{_net_forward.1} parent=1 // pred_fallthru
      _
    // Predicated region
    $region10: #{_net_forward.1} parent=1 // pred_check
      _
    $region11: #{_net_forward.1} parent=1 // pred_check_branch
      %40 = sbr.rel (0) target = $region13
    $region12: #{_net_forward.1} parent=1 // pred_region
      _
    $region13: #{_net_forward.1} parent=1 // pred_fallthru
      _
    // Predicated region
    $region14: #{_net_forward.1} parent=1 // pred_check
      _
    $region15: #{_net_forward.1} parent=1 // pred_check_branch
      %42 = sbr.rel (0) target = $region17
    $region16: #{_net_forward.1} parent=1 // pred_region
      %44 = vsyncadd [#allocation6], 0
      %s45 = sshll.u32 %s3, 4
      %s46 = int_to_ptr.hbm [resolvable:$true] %s45
      %s47 = sshll.u32 [#allocation7], 4
      %s48 = int_to_ptr.vmem [resolvable:$true] %s47
      %53 = dma.hbm_to_vmem [thread:$0]  %s46, 2048, %s48, [#allocation6], 128, 128, 8
    $region17: #{_net_forward.1} parent=1 // pred_fallthru
      _
    // Predicated region
    $region18: #{_net_forward.1} parent=1 // pred_check
      _
    $region19: #{_net_forward.1} parent=1 // pred_check_branch
      %55 = sbr.rel (0) target = $region21
    $region20: #{_net_forward.1} parent=1 // pred_region
      _
    $region21: #{_net_forward.1} parent=1 // pred_fallthru
      _
    // Predicated region
    $region22: #{_net_forward.1} parent=1 // pred_check
      _
    $region23: #{_net_forward.1} parent=1 // pred_check_branch
      %57 = sbr.rel (0) target = $region25
    $region24: #{_net_forward.1} parent=1 // pred_region
      %59 = dma.done [#allocation3], 256
    $region25: #{_net_forward.1} parent=1 // pred_fallthru
      _
    // Predicated region
    $region26: #{_net_forward.1} parent=1 // pred_check
      _
    $region27: #{_net_forward.1} parent=1 // pred_check_branch
      %61 = sbr.rel (0) target = $region29
    $region28: #{_net_forward.1} parent=1 // pred_region
      %63 = dma.done [#allocation6], 3200
    $region29: #{_net_forward.1} parent=1 // pred_fallthru
      _
    // Predicated region
    $region30: #{_net_forward.1} parent=1 // pred_check
      _
    $region31: #{_net_forward.1} parent=1 // pred_check_branch
      %65 = sbr.rel (0) target = $region33
    $region32: #{_net_forward.1} parent=1 // pred_region
      %67 = dma.done [#allocation6], 2048
    $region33: #{_net_forward.1} parent=1 // pred_fallthru
      _
    %v68 = vld [vmem:[#allocation2] sm:$0xf]
    %v69 = vld [vmem:[#allocation2 + $0x4] sm:$0xf]
    %v70 = vld [vmem:[#allocation2 + $0x8] sm:$0xf]
    %v71 = vld [vmem:[#allocation2 + $0xc] sm:$0xf]
    %v72 = vld [vmem:[#allocation5] sm:$0xff]
    %v73 = vld [vmem:[#allocation5 + $0x8] sm:$0xff]
    %v74 = vld [vmem:[#allocation5 + $0x10] sm:$0xff]
    %v75 = vld [vmem:[#allocation5 + $0x18] sm:$0xff]
    %v76 = vld [vmem:[#allocation5 + $0x20] sm:$0xff]
    %v77 = vld [vmem:[#allocation5 + $0x28] sm:$0xff]
    %v78 = vld [vmem:[#allocation5 + $0x30] sm:$0xff]
    %v79 = vld [vmem:[#allocation5 + $0x38] sm:$0xff]
    %v80 = vld [vmem:[#allocation5 + $0x40] sm:$0xff]
    %v81 = vld [vmem:[#allocation5 + $0x48] sm:$0xff]
    %v82 = vld [vmem:[#allocation5 + $0x50] sm:$0xff]
    %v83 = vld [vmem:[#allocation5 + $0x58] sm:$0xff]
    %v84 = vld [vmem:[#allocation5 + $0x60] sm:$0xff]
    %v85 = vld [vmem:[#allocation5 + $0x68] sm:$0xff]
    %v86 = vld [vmem:[#allocation5 + $0x70] sm:$0xff]
    %v87 = vld [vmem:[#allocation5 + $0x78] sm:$0xff]
    %v88 = vld [vmem:[#allocation5 + $0x80] sm:$0xff]
    %v89 = vld [vmem:[#allocation5 + $0x88] sm:$0xff]
    %v90 = vld [vmem:[#allocation5 + $0x90] sm:$0xff]
    %v91 = vld [vmem:[#allocation5 + $0x98] sm:$0xff]
    %v92 = vld [vmem:[#allocation5 + $0xa0] sm:$0xff]
    %v93 = vld [vmem:[#allocation5 + $0xa8] sm:$0xff]
    %v94 = vld [vmem:[#allocation5 + $0xb0] sm:$0xff]
    %v95 = vld [vmem:[#allocation5 + $0xb8] sm:$0xff]
    %v96 = vld [vmem:[#allocation5 + $0xc0] sm:$0xf]
    %v97 = vld [vmem:[%s2] sm:$0x1]
    %v99 = vperm.slane %v97, 0
    %105 = vst [vmem:[#allocation1] ss:$4 sm:$0xff] %v68
    %s106 = scalar_lea.vmem [#allocation1], 1
    %107 = vst [vmem:[%s106] ss:$4 sm:$0xff] %v69
    %s108 = scalar_lea.vmem [#allocation1], 2
    %109 = vst [vmem:[%s108] ss:$4 sm:$0xff] %v70
    %s110 = scalar_lea.vmem [#allocation1], 3
    %111 = vst [vmem:[%s110] ss:$4 sm:$0xff] %v71
    %v112 = vld.sshfl [vmem:[#allocation1] sm:$0xff pattern:$0x73625140]
    %v113 = vld.sshfl [vmem:[#allocation1 + $0x8] sm:$0xff pattern:$0x73625140]
    %vm115 = vcmask 556032
    %v116 = vsel %vm115, %v113, 0
    %vm118 = vcmask 1043456
    %v120 = vsel %vm118, %v96, 0
    %122 = vmatpush.msra.mxu0 %v87
    %123 = vmatpush.msra.mxu0 %v86
    %124 = vmatpush.msra.mxu0 %v85
    %125 = vmatpush.msra.mxu0 %v84
    %126 = vmatpush.msra.mxu0 %v83
    %127 = vmatpush.msra.mxu0 %v82
    %128 = vmatpush.msra.mxu0 %v81
    %129 = vmatpush.msra.mxu0 %v80
    %130 = vmatpush.msra.mxu0 %v79
    %131 = vmatpush.msra.mxu0 %v78
    %132 = vmatpush.msra.mxu0 %v77
    %133 = vmatpush.msra.mxu0 %v76
    %134 = vmatpush.msra.mxu0 %v75
    %135 = vmatpush.msra.mxu0 %v74
    %136 = vmatpush.msra.mxu0 %v73
    %137 = vmatpush.msra.mxu0 %v72
    %138 = vmatmul.f32.gmra.mxu0 %v112
    %v139 = vpop.f32.mrf.mxu0
    %v140 = vadd.f32 %v99, %v139
    %141 = vdwg.mxu0
    %142 = vmatpush.msra.mxu0 0.0
    %143 = vmatpush.msra.mxu0 0.0
    %144 = vmatpush.msra.mxu0 0.0
    %145 = vmatpush.msra.mxu0 0.0
    %146 = vmatpush.msra.mxu0 0.0
    %147 = vmatpush.msra.mxu0 0.0
    %148 = vmatpush.msra.mxu0 0.0
    %149 = vmatpush.msra.mxu0 %v120
    %150 = vmatpush.msra.mxu0 %v95
    %151 = vmatpush.msra.mxu0 %v94
    %152 = vmatpush.msra.mxu0 %v93
    %153 = vmatpush.msra.mxu0 %v92
    %154 = vmatpush.msra.mxu0 %v91
    %155 = vmatpush.msra.mxu0 %v90
    %156 = vmatpush.msra.mxu0 %v89
    %157 = vmatpush.msra.mxu0 %v88
    %158 = vmatmul.f32.gmra.mxu0 %v116
    %v159 = vpop.f32.mrf.mxu0
    %v160 = vadd.f32 %v140, %v159
    %161 = vdwg.mxu0
    %v162 = vmax.f32 %v160, 0.0
    %v163 = vld [vmem:[#allocation7] sm:$0xff]
    %v164 = vld [vmem:[#allocation7 + $0x8] sm:$0xff]
    %v165 = vld [vmem:[#allocation7 + $0x10] sm:$0xff]
    %v166 = vld [vmem:[#allocation7 + $0x18] sm:$0xff]
    %v167 = vld [vmem:[#allocation7 + $0x20] sm:$0xff]
    %v168 = vld [vmem:[#allocation7 + $0x28] sm:$0xff]
    %v169 = vld [vmem:[#allocation7 + $0x30] sm:$0xff]
    %v170 = vld [vmem:[#allocation7 + $0x38] sm:$0xff]
    %v171 = vld [vmem:[#allocation7 + $0x40] sm:$0xff]
    %v172 = vld [vmem:[#allocation7 + $0x48] sm:$0xff]
    %v173 = vld [vmem:[#allocation7 + $0x50] sm:$0xff]
    %v174 = vld [vmem:[#allocation7 + $0x58] sm:$0xff]
    %v175 = vld [vmem:[#allocation7 + $0x60] sm:$0xff]
    %v176 = vld [vmem:[#allocation7 + $0x68] sm:$0xff]
    %v177 = vld [vmem:[#allocation7 + $0x70] sm:$0xff]
    %v178 = vld [vmem:[#allocation7 + $0x78] sm:$0xff]
    %v179 = vld [vmem:[%s4] sm:$0x1]
    %v181 = vperm.slane %v179, 0
    %183 = vmatpush.msra.mxu0 %v178
    %184 = vmatpush.msra.mxu0 %v177
    %185 = vmatpush.msra.mxu0 %v176
    %186 = vmatpush.msra.mxu0 %v175
    %187 = vmatpush.msra.mxu0 %v174
    %188 = vmatpush.msra.mxu0 %v173
    %189 = vmatpush.msra.mxu0 %v172
    %190 = vmatpush.msra.mxu0 %v171
    %191 = vmatpush.msra.mxu0 %v170
    %192 = vmatpush.msra.mxu0 %v169
    %193 = vmatpush.msra.mxu0 %v168
    %194 = vmatpush.msra.mxu0 %v167
    %195 = vmatpush.msra.mxu0 %v166
    %196 = vmatpush.msra.mxu0 %v165
    %197 = vmatpush.msra.mxu0 %v164
    %198 = vmatpush.msra.mxu0 %v163
    %199 = vmatmul.f32.gmra.mxu0 %v162
    %v200 = vpop.f32.mrf.mxu0
    %v201 = vadd.f32 %v181, %v200
    %202 = vdwg.mxu0
    %203 = vst [vmem:[#allocation8] sm:$0xff] %v201
    // Predicated region
    $region34: #{_net_forward.1} parent=1 // pred_check
      _
    $region35: #{_net_forward.1} parent=1 // pred_check_branch
      %205 = sbr.rel (0) target = $region37
    $region36: #{_net_forward.1} parent=1 // pred_region
      %207 = vsyncadd [#allocation4], 96
      %s208 = sshll.u32 [#allocation8], 4
      %s209 = int_to_ptr.vmem [resolvable:$true] %s208
      %s210 = sshll.u32 %s5, 4
      %s211 = int_to_ptr.hbm [resolvable:$true] %s210
      %216 = dma.vmem_to_hbm [thread:$0]  %s209, 32, %s211, [#allocation4], 32, 32, 2
    $region37: #{_net_forward.1} parent=1 // pred_fallthru
      _
    // Predicated region
    $region38: #{_net_forward.1} parent=1 // pred_check
      _
    $region39: #{_net_forward.1} parent=1 // pred_check_branch
      %218 = sbr.rel (0) target = $region41
    $region40: #{_net_forward.1} parent=1 // pred_region
      %220 = dma.done [#allocation4], 128
    $region41: #{_net_forward.1} parent=1 // pred_fallthru
      _
    %221 = vsyncpa [#allocation3], 1
    %222 = vsyncpa [#allocation6], 1
    %223 = vsyncpa [#allocation4], 1

</llo_original>
